<compile_context>
chip_gen: v5e
topology: v5e:2x2
jax: 0.10.0
libtpu: 0.0.40
codegen_flags: <defaults>
</compile_context>

<pallas_src>
import jax
import jax.numpy as jnp
from jax.experimental import pallas as pl
from jax.experimental.pallas import tpu as pltpu


def _round_up(n, m):
    return ((n + m - 1) // m) * m


def _pad_to(a, shape):
    """Zero-pad array `a` up to `shape` (trailing pad on each axis)."""
    pads = [(0, t - s) for s, t in zip(a.shape, shape)]
    if all(p == (0, 0) for p in pads):
        return a
    return jnp.pad(a, pads)


def mlp3_kernel(x_ref, w1_ref, b1_ref, w2_ref, b2_ref, o_ref):
    # In-kernel f32 -> bf16 cast of the activations (trivial VPU work hidden
    # under the DMA/MXU); layer 1 runs on the native bf16 MXU path with f32
    # accumulation.
    x = x_ref[...].astype(jnp.bfloat16)
    h = jnp.dot(x, w1_ref[...], preferred_element_type=jnp.float32)
    # Bias + ReLU in f32 on the VPU (hidden dim padded to 128 -> lane-dense).
    h = jnp.maximum(h + b1_ref[...], 0.0)
    # Round activations to bf16 so layer 2 also uses the bf16 MXU path.
    y = jnp.dot(h.astype(jnp.bfloat16), w2_ref[...],
                preferred_element_type=jnp.float32)
    # bf16 logits out: halves the kernel write and the wrapper slice read.
    o_ref[...] = (y + b2_ref[...]).astype(o_ref.dtype)


def prepare_mlp3_params(w1, b1, w2, b2):
    """Pad/cast the (small) parameters once; reuse across forward calls.

    w1: (784, d_hidden), b1: (d_hidden,) or (1, d_hidden)
    w2: (d_hidden, num_classes), b2: (num_classes,) or (1, num_classes)
    """
    d_in, d_hidden = w1.shape
    n_cls = w2.shape[1]

    d_h_pad = _round_up(d_hidden, 128)   # 100 -> 128 (do NOT pad to 256)
    n_c_pad = _round_up(n_cls, 128)      # 10  -> 128

    b1 = jnp.reshape(b1, (1, d_hidden))
    b2 = jnp.reshape(b2, (1, n_cls))

    # Zero padding is mathematically inert: padded hidden lanes get weight 0 /
    # bias 0 -> ReLU(0)=0 -> contribute nothing; padded class cols sliced off.
    w1_b = _pad_to(w1, (d_in, d_h_pad)).astype(jnp.bfloat16)
    b1_f = _pad_to(b1, (1, d_h_pad)).astype(jnp.float32)
    w2_b = _pad_to(w2, (d_h_pad, n_c_pad)).astype(jnp.bfloat16)
    b2_f = _pad_to(b2, (1, n_c_pad)).astype(jnp.float32)

    return {
        "w1": w1_b, "b1": b1_f, "w2": w2_b, "b2": b2_f,
        "d_in": d_in, "d_h_pad": d_h_pad, "n_c_pad": n_c_pad, "n_cls": n_cls,
    }


def _pick_block(batch, block_b):
    # Multiple of 16 so the bf16 output tile is natively packed (f32 x only
    # needs 8).  Aim for >=2 grid steps whenever the batch allows, so v7x's
    # two TensorCores both get work via dimension_semantics=("parallel",).
    blk = min(block_b, _round_up(pl.cdiv(batch, 2), 16))
    blk = max(16, _round_up(blk, 16))
    # Hard cap: double-buffered f32 x tiles (2 * blk * 784 * 4 B) must stay
    # comfortably inside v7x's scoped VMEM (32 MiB default, 64 MiB physical).
    return min(blk, 2048)


def mlp3_forward(x, params, *, block_b=1024):
    """Fused MLP3 forward.

    x: (B, 784) float32.  params: output of prepare_mlp3_params.
    Returns (B, num_classes) float32 logits
    (matches x @ W1 + b1 -> ReLU -> @ W2 + b2, bf16 matmul precision).
    """
    B, d_in = x.shape
    assert d_in == params["d_in"]
    d_h_pad = params["d_h_pad"]
    n_c_pad = params["n_c_pad"]
    n_cls = params["n_cls"]

    blk = _pick_block(B, block_b)
    grid = (pl.cdiv(B, blk),)  # ragged final block handled by Pallas masking

    out = pl.pallas_call(
        mlp3_kernel,
        out_shape=jax.ShapeDtypeStruct((B, n_c_pad), jnp.bfloat16),
        grid=grid,
        in_specs=[
            pl.BlockSpec((blk, d_in), lambda i: (i, 0)),         # x tile (pipelined)
            pl.BlockSpec((d_in, d_h_pad), lambda i: (0, 0)),     # W1 resident
            pl.BlockSpec((1, d_h_pad), lambda i: (0, 0)),        # b1 resident
            pl.BlockSpec((d_h_pad, n_c_pad), lambda i: (0, 0)),  # W2 resident
            pl.BlockSpec((1, n_c_pad), lambda i: (0, 0)),        # b2 resident
        ],
        out_specs=pl.BlockSpec((blk, n_c_pad), lambda i: (i, 0)),
        compiler_params=pltpu.CompilerParams(
            dimension_semantics=("parallel",),   # v7x: shard batch over 2 TCs
            vmem_limit_bytes=32 * 1024 * 1024,   # headroom for big f32 x tiles
        ),
    )(x, params["w1"], params["b1"], params["w2"], params["b2"])

    # Strip class padding; upcast bf16 logits back to the module's f32.
    return out[:, :n_cls].astype(jnp.float32)


def init_params(key, d_in=28 * 28, d_hidden=100, num_classes=10):
    """Mimic nn.Linear's uniform(-1/sqrt(fan_in), 1/sqrt(fan_in)) init."""
    k1, k2, k3, k4 = jax.random.split(key, 4)
    bound1 = 1.0 / jnp.sqrt(jnp.float32(d_in))
    bound2 = 1.0 / jnp.sqrt(jnp.float32(d_hidden))
    w1 = jax.random.uniform(k1, (d_in, d_hidden), jnp.float32, -bound1, bound1)
    b1 = jax.random.uniform(k2, (1, d_hidden), jnp.float32, -bound1, bound1)
    w2 = jax.random.uniform(k3, (d_hidden, num_classes), jnp.float32, -bound2, bound2)
    b2 = jax.random.uniform(k4, (1, num_classes), jnp.float32, -bound2, bound2)
    return w1, b1, w2, b2


if __name__ == "__main__":
    key = jax.random.PRNGKey(0)
    kx, kp = jax.random.split(key)

    # B=24 exercises both a multi-step grid (>=2 tiles) and a ragged last tile.
    B, d_in, d_hidden, num_classes = 24, 28 * 28, 100, 10

    # Input like MNIST images (B, 1, 28, 28), flattened as in x.view(B, -1).
    x_img = jax.random.normal(kx, (B, 1, 28, 28), jnp.float32)
    x = x_img.reshape(B, -1)  # (B, 784)

    w1, b1, w2, b2 = init_params(kp, d_in, d_hidden, num_classes)

    params = prepare_mlp3_params(w1, b1, w2, b2)   # pad/cast once, reuse
    out = mlp3_forward(x, params)
    out = jax.block_until_ready(out)
    assert out.shape == (B, num_classes)

    # Reference on the same bf16-input / f32-accumulate / bf16-output path.
    xb = x.astype(jnp.bfloat16)
    w1b = w1.astype(jnp.bfloat16)
    w2b = w2.astype(jnp.bfloat16)
    h_ref = jnp.maximum(
        jnp.dot(xb, w1b, preferred_element_type=jnp.float32) + b1, 0.0)
    ref_bf16 = (jnp.dot(h_ref.astype(jnp.bfloat16), w2b,
                        preferred_element_type=jnp.float32) + b2)
    ref_bf16 = ref_bf16.astype(jnp.bfloat16).astype(jnp.float32)
    assert jnp.allclose(out, ref_bf16, atol=1e-2, rtol=1e-2)

    # Loose check against the original full-f32 module math (bf16 rounding only).
    ref_f32 = jnp.maximum(x @ w1 + b1, 0.0) @ w2 + b2
    assert jnp.allclose(out, ref_f32, atol=5e-2, rtol=5e-2)

    print("KERNEL_OK")
</pallas_src>

<mosaic_0001>
module attributes {stable_mosaic.version = 11 : i64} {
  func.func @mlp3_kernel(%arg0: i32, %arg1: memref<16x784xf32, #tpu.memory_space<vmem>>, %arg2: memref<784x128xbf16, #tpu.memory_space<vmem>>, %arg3: memref<1x128xf32, #tpu.memory_space<vmem>>, %arg4: memref<128x128xbf16, #tpu.memory_space<vmem>>, %arg5: memref<1x128xf32, #tpu.memory_space<vmem>>, %arg6: memref<16x128xbf16, #tpu.memory_space<vmem>>) attributes {dimension_semantics = [#tpu.dimension_semantics<parallel>], iteration_bounds = array<i64: 2>, scalar_prefetch = 0 : i64, scratch_operands = 0 : i64, tpu.core_type = #tpu.core_type<tc>, window_params = [{transform_indices = @transform_0, window_bounds = array<i64: 16, 784>}, {pipeline_mode = #tpu.pipeline_mode<synchronous>, transform_indices = @transform_1, window_bounds = array<i64: 784, 128>}, {pipeline_mode = #tpu.pipeline_mode<synchronous>, transform_indices = @transform_2, window_bounds = array<i64: 1, 128>}, {pipeline_mode = #tpu.pipeline_mode<synchronous>, transform_indices = @transform_3, window_bounds = array<i64: 128, 128>}, {pipeline_mode = #tpu.pipeline_mode<synchronous>, transform_indices = @transform_4, window_bounds = array<i64: 1, 128>}, {transform_indices = @transform_5, window_bounds = array<i64: 16, 128>}]} {
    %c0 = arith.constant 0 : index
    %c0_0 = arith.constant 0 : index
    %0 = vector.load %arg1[%c0, %c0_0] : memref<16x784xf32, #tpu.memory_space<vmem>>, vector<16x784xf32>
    %1 = arith.truncf %0 : vector<16x784xf32> to vector<16x784xbf16>
    %c0_1 = arith.constant 0 : index
    %c0_2 = arith.constant 0 : index
    %2 = vector.load %arg2[%c0_1, %c0_2] : memref<784x128xbf16, #tpu.memory_space<vmem>>, vector<784x128xbf16>
    %cst = arith.constant dense<0.000000e+00> : vector<16x128xf32>
    %3 = tpu.matmul %1, %2, %cst {dimension_numbers = #tpu.dot_dimension_numbers<[1], [0], [0], [1], [0, 0, 1, 1], [], []>} : vector<16x784xbf16>, vector<784x128xbf16>, vector<16x128xf32> -> vector<16x128xf32>
    %c0_3 = arith.constant 0 : index
    %c0_4 = arith.constant 0 : index
    %4 = vector.load %arg3[%c0_3, %c0_4] : memref<1x128xf32, #tpu.memory_space<vmem>>, vector<1x128xf32>
    %5 = vector.broadcast %4 : vector<1x128xf32> to vector<16x128xf32>
    %6 = arith.addf %3, %5 : vector<16x128xf32>
    %cst_5 = arith.constant 0.000000e+00 : f32
    %7 = vector.broadcast %cst_5 : f32 to vector<16x128xf32>
    %8 = arith.maximumf %6, %7 : vector<16x128xf32>
    %9 = arith.truncf %8 : vector<16x128xf32> to vector<16x128xbf16>
    %c0_6 = arith.constant 0 : index
    %c0_7 = arith.constant 0 : index
    %10 = vector.load %arg4[%c0_6, %c0_7] : memref<128x128xbf16, #tpu.memory_space<vmem>>, vector<128x128xbf16>
    %cst_8 = arith.constant dense<0.000000e+00> : vector<16x128xf32>
    %11 = tpu.matmul %9, %10, %cst_8 {dimension_numbers = #tpu.dot_dimension_numbers<[1], [0], [0], [1], [0, 0, 1, 1], [], []>} : vector<16x128xbf16>, vector<128x128xbf16>, vector<16x128xf32> -> vector<16x128xf32>
    %c0_9 = arith.constant 0 : index
    %c0_10 = arith.constant 0 : index
    %12 = vector.load %arg5[%c0_9, %c0_10] : memref<1x128xf32, #tpu.memory_space<vmem>>, vector<1x128xf32>
    %13 = vector.broadcast %12 : vector<1x128xf32> to vector<16x128xf32>
    %14 = arith.addf %11, %13 : vector<16x128xf32>
    %15 = arith.truncf %14 : vector<16x128xf32> to vector<16x128xbf16>
    %c0_11 = arith.constant 0 : index
    %c0_12 = arith.constant 0 : index
    %16 = vector.load %arg6[%c0_11, %c0_12] : memref<16x128xbf16, #tpu.memory_space<vmem>>, vector<16x128xbf16>
    tpu.vector_store %arg6[%c0_11, %c0_12], %15 {strides = array<i32>} : memref<16x128xbf16, #tpu.memory_space<vmem>>, vector<16x128xbf16>,
    return
  }
  func.func @transform_0(%arg0: i32) -> (i32, i32) {
    %c0_i32 = arith.constant 0 : i32
    %c0_i32_0 = arith.constant 0 : i32
    return %arg0, %c0_i32 : i32, i32
  }
  func.func @transform_1(%arg0: i32) -> (i32, i32) {
    %c0_i32 = arith.constant 0 : i32
    %c0_i32_0 = arith.constant 0 : i32
    %c0_i32_1 = arith.constant 0 : i32
    return %c0_i32, %c0_i32_0 : i32, i32
  }
  func.func @transform_2(%arg0: i32) -> (i32, i32) {
    %c0_i32 = arith.constant 0 : i32
    %c0_i32_0 = arith.constant 0 : i32
    %c0_i32_1 = arith.constant 0 : i32
    return %c0_i32, %c0_i32_0 : i32, i32
  }
  func.func @transform_3(%arg0: i32) -> (i32, i32) {
    %c0_i32 = arith.constant 0 : i32
    %c0_i32_0 = arith.constant 0 : i32
    %c0_i32_1 = arith.constant 0 : i32
    return %c0_i32, %c0_i32_0 : i32, i32
  }
  func.func @transform_4(%arg0: i32) -> (i32, i32) {
    %c0_i32 = arith.constant 0 : i32
    %c0_i32_0 = arith.constant 0 : i32
    %c0_i32_1 = arith.constant 0 : i32
    return %c0_i32, %c0_i32_0 : i32, i32
  }
  func.func @transform_5(%arg0: i32) -> (i32, i32) {
    %c0_i32 = arith.constant 0 : i32
    %c0_i32_0 = arith.constant 0 : i32
    return %arg0, %c0_i32 : i32, i32
  }
}

</mosaic_0001>

<llo_original>
// kernel: tpu_custom_call.1
$region0: #{tpu_custom_call.1}
  #allocation0 [shape = 'u32[]', space=smem, size = 0x4, offset = 0x4, fixed_abs, tag = 'smem constant byte address 0x4 - core index']
  #allocation1 [shape = 'u32[72,128]{1,0:T(1,128)}', space=vmem, size = 0x9000, scoped, tag = 'internal scratch']
  %s0 = inlined_call_operand.hbm [shape: f32[24,784], index: 0, kind: input, shape index: {}]
  %s1 = inlined_call_operand.hbm [shape: bf16[784,128], index: 1, kind: input, shape index: {}]
  %s2 = inlined_call_operand.vmem [shape: f32[1,128], index: 2, kind: input, shape index: {}]
  %s3 = inlined_call_operand.hbm [shape: bf16[128,128], index: 3, kind: input, shape index: {}]
  %s4 = inlined_call_operand.vmem [shape: f32[1,128], index: 4, kind: input, shape index: {}]
  %s5 = inlined_call_operand.hbm [shape: bf16[24,128], index: 5, kind: output, shape index: {}]
  %s6 = sld [smem:[#allocation0]]
  $region65: #{tpu_custom_call.1} parent=0
    _
  %s8 = ssub.s32 1, %s6
  %s9 = scalar_select 0, %s8, %s6
  $region1: #{tpu_custom_call.1} parent=0
    #allocation2 [shape = 'u8[114688]{0}', space=vmem, size = 0x1c000, scoped, tag = 'input window, operand 0']
    #allocation3 [shape = 's32[2]{0}', space=sflag, size = 0x8, scoped, tag = 'scoped memory for tpu_custom_call.1']
    #allocation4 [shape = 's32[2]{0}', space=sflag, size = 0x8, scoped, tag = 'scoped memory for tpu_custom_call.1']
    #allocation5 [shape = 'u8[200704]{0}', space=vmem, size = 0x31000, scoped, tag = 'input window, operand 1, single buffered']
    #allocation6 [shape = 's32[1]{0}', space=sflag, size = 0x4, scoped, tag = 'scoped memory for tpu_custom_call.1']
    #allocation7 [shape = 'u8[32768]{0}', space=vmem, size = 0x8000, scoped, tag = 'input window, operand 3, single buffered']
    #allocation8 [shape = 'u8[8192]{0}', space=vmem, size = 0x2000, scoped, tag = 'output window, operand 0']
    %10 = vsyncpa [#allocation3], 0
    %s11 = scalar_lea.sflag [#allocation3], 1
    %12 = vsyncpa %s11, 0
    %13 = vsyncpa [#allocation6], 0
    %14 = vsyncpa [#allocation4], 0
    %s15 = scalar_lea.sflag [#allocation4], 1
    %16 = vsyncpa %s15, 0
    loop: start=0, step=1, limit=4
    $region2: #{tpu_custom_call.1} parent=1 // loop_pre_header
      _
    $region3: #{tpu_custom_call.1} parent=1 // loop_header
      %s18 = sphi 0, %s22
      %p19 = scmp.ge.s32.totalorder %s18, 4
      %s28 = sphi 0, %s30
      %s31 = sphi 0, %s28
      %s32 = sphi 0, %s31
      %s48 = sphi 0, %s32
      %s52 = sphi 0, %s52
      %s54 = sphi 0, %s52
      %s55 = sphi 0, %s54
      %s69 = sphi 0, %s55
      %s73 = sphi 0, %s73
      %s75 = sphi 0, %s73
      %s76 = sphi 0, %s75
      %s90 = sphi 0, %s76
      %s94 = sphi 0, %s94
      %s96 = sphi 0, %s94
      %s97 = sphi 0, %s96
      %s111 = sphi 0, %s97
      %s115 = sphi 0, %s115
      %s117 = sphi 0, %s115
      %s118 = sphi 0, %s117
      %s132 = sphi 0, %s118
      %s138 = sphi 0, %s140
      %s141 = sphi 0, %s138
      %s142 = sphi 0, %s141
      %s158 = sphi 0, %s142
    $region4: #{tpu_custom_call.1} parent=1 // loop_header_branch
      %21 = sbr.rel (%p19) target = $region8
    $region5: #{tpu_custom_call.1} parent=1 // loop_body
      %s23 = ssub.s32 %s18, 1
      %s24 = ssub.s32 %s18, 2
      %s25 = sadd.s32 %s18, 1
      %s26 = ssub.s32 %s18, %s25
      %p27 = scmp.eq.s32.totalorder %s26, 0
      %s29 = sadd.s32 %s28, 1
      %s30 = scalar_select %p27, %s28, %s29
      %p33 = pneg %p27
      %p34 = scmp.eq.s32.totalorder %s18, 1
      %p35 = por %p33, %p34
      %p36 = scmp.ne.s32.totalorder %s28, %s31
      %p37 = scmp.eq.s32.totalorder %s18, 0
      %p38 = por %p36, %p37
      %p39 = scmp.ne.s32.totalorder %s28, %s31
      %p40 = scmp.eq.s32.totalorder %s23, 1
      %p41 = por %p39, %p40
      %p42 = scmp.ne.s32.totalorder %s31, %s32
      %p43 = scmp.eq.s32.totalorder %s23, 0
      %p44 = por %p42, %p43
      %p45 = scmp.ne.s32.totalorder %s31, %s32
      %p46 = scmp.eq.s32.totalorder %s24, 1
      %p47 = por %p45, %p46
      %p49 = scmp.ne.s32.totalorder %s32, %s48
      %p50 = scmp.eq.s32.totalorder %s24, 0
      %p51 = por %p49, %p50
      %s53 = sadd.s32 %s52, 1
      %p56 = scmp.eq.s32.totalorder %s18, 1
      %p57 = scmp.ne.s32.totalorder %s52, %s54
      %p58 = scmp.eq.s32.totalorder %s18, 0
      %p59 = por %p57, %p58
      %p60 = scmp.ne.s32.totalorder %s52, %s54
      %p61 = scmp.eq.s32.totalorder %s23, 1
      %p62 = por %p60, %p61
      %p63 = scmp.ne.s32.totalorder %s54, %s55
      %p64 = scmp.eq.s32.totalorder %s23, 0
      %p65 = por %p63, %p64
      %p66 = scmp.ne.s32.totalorder %s54, %s55
      %p67 = scmp.eq.s32.totalorder %s24, 1
      %p68 = por %p66, %p67
      %p70 = scmp.ne.s32.totalorder %s55, %s69
      %p71 = scmp.eq.s32.totalorder %s24, 0
      %p72 = por %p70, %p71
      %s74 = sadd.s32 %s73, 1
      %p77 = scmp.eq.s32.totalorder %s18, 1
      %p78 = scmp.ne.s32.totalorder %s73, %s75
      %p79 = scmp.eq.s32.totalorder %s18, 0
      %p80 = por %p78, %p79
      %p81 = scmp.ne.s32.totalorder %s73, %s75
      %p82 = scmp.eq.s32.totalorder %s23, 1
      %p83 = por %p81, %p82
      %p84 = scmp.ne.s32.totalorder %s75, %s76
      %p85 = scmp.eq.s32.totalorder %s23, 0
      %p86 = por %p84, %p85
      %p87 = scmp.ne.s32.totalorder %s75, %s76
      %p88 = scmp.eq.s32.totalorder %s24, 1
      %p89 = por %p87, %p88
      %p91 = scmp.ne.s32.totalorder %s76, %s90
      %p92 = scmp.eq.s32.totalorder %s24, 0
      %p93 = por %p91, %p92
      %s95 = sadd.s32 %s94, 1
      %p98 = scmp.eq.s32.totalorder %s18, 1
      %p99 = scmp.ne.s32.totalorder %s94, %s96
      %p100 = scmp.eq.s32.totalorder %s18, 0
      %p101 = por %p99, %p100
      %p102 = scmp.ne.s32.totalorder %s94, %s96
      %p103 = scmp.eq.s32.totalorder %s23, 1
      %p104 = por %p102, %p103
      %p105 = scmp.ne.s32.totalorder %s96, %s97
      %p106 = scmp.eq.s32.totalorder %s23, 0
      %p107 = por %p105, %p106
      %p108 = scmp.ne.s32.totalorder %s96, %s97
      %p109 = scmp.eq.s32.totalorder %s24, 1
      %p110 = por %p108, %p109
      %p112 = scmp.ne.s32.totalorder %s97, %s111
      %p113 = scmp.eq.s32.totalorder %s24, 0
      %p114 = por %p112, %p113
      %s116 = sadd.s32 %s115, 1
      %p119 = scmp.eq.s32.totalorder %s18, 1
      %p120 = scmp.ne.s32.totalorder %s115, %s117
      %p121 = scmp.eq.s32.totalorder %s18, 0
      %p122 = por %p120, %p121
      %p123 = scmp.ne.s32.totalorder %s115, %s117
      %p124 = scmp.eq.s32.totalorder %s23, 1
      %p125 = por %p123, %p124
      %p126 = scmp.ne.s32.totalorder %s117, %s118
      %p127 = scmp.eq.s32.totalorder %s23, 0
      %p128 = por %p126, %p127
      %p129 = scmp.ne.s32.totalorder %s117, %s118
      %p130 = scmp.eq.s32.totalorder %s24, 1
      %p131 = por %p129, %p130
      %p133 = scmp.ne.s32.totalorder %s118, %s132
      %p134 = scmp.eq.s32.totalorder %s24, 0
      %p135 = por %p133, %p134
      %s136 = ssub.s32 %s18, %s25
      %p137 = scmp.eq.s32.totalorder %s136, 0
      %s139 = sadd.s32 %s138, 1
      %s140 = scalar_select %p137, %s138, %s139
      %p143 = pneg %p137
      %p144 = scmp.eq.s32.totalorder %s18, 1
      %p145 = por %p143, %p144
      %p146 = scmp.ne.s32.totalorder %s138, %s141
      %p147 = scmp.eq.s32.totalorder %s18, 0
      %p148 = por %p146, %p147
      %p149 = scmp.ne.s32.totalorder %s138, %s141
      %p150 = scmp.eq.s32.totalorder %s23, 1
      %p151 = por %p149, %p150
      %p152 = scmp.ne.s32.totalorder %s141, %s142
      %p153 = scmp.eq.s32.totalorder %s23, 0
      %p154 = por %p152, %p153
      %p155 = scmp.ne.s32.totalorder %s141, %s142
      %p156 = scmp.eq.s32.totalorder %s24, 1
      %p157 = por %p155, %p156
      %p159 = scmp.ne.s32.totalorder %s142, %s158
      %p160 = scmp.eq.s32.totalorder %s24, 0
      %p161 = por %p159, %p160
      %p162 = scmp.le.s32.totalorder 1, %s18
      %p163 = scmp.lt.s32.totalorder %s18, 3
      %p164 = pnand %p162, %p163
      %p165 = pneg %p164
      // Predicated region
      $region9: #{tpu_custom_call.1} parent=5 // pred_check
        _
      $region10: #{tpu_custom_call.1} parent=5 // pred_check_branch
        %167 = sbr.rel (%p164) target = $region12
      $region11: #{tpu_custom_call.1} parent=5 // pred_region
        %s168 = ssub.s32 %s18, 1
        // Predicated region
        $region13: #{tpu_custom_call.1} parent=11 // pred_check
          %p169 = pneg %p65
        $region14: #{tpu_custom_call.1} parent=11 // pred_check_branch
          %171 = sbr.rel (%p169) target = $region16
        $region15: #{tpu_custom_call.1} parent=11 // pred_region
          %173 = vsyncadd [#allocation6], 0
          %s174 = sshll.u32 %s1, 4
          %s175 = int_to_ptr.hbm [resolvable:$true] %s174
          %s176 = sshll.u32 [#allocation5], 4
          %s177 = int_to_ptr.vmem [resolvable:$true] %s176
          %182 = dma.hbm_to_vmem [thread:$0]  %s175, 6272, %s177, [#allocation6], 64, 64, 4
        $region16: #{tpu_custom_call.1} parent=11 // pred_fallthru
          _
        // Predicated region
        $region17: #{tpu_custom_call.1} parent=11 // pred_check
          %p183 = pneg %p86
        $region18: #{tpu_custom_call.1} parent=11 // pred_check_branch
          %185 = sbr.rel (%p183) target = $region20
        $region19: #{tpu_custom_call.1} parent=11 // pred_region
          _
        $region20: #{tpu_custom_call.1} parent=11 // pred_fallthru
          _
        // Predicated region
        $region21: #{tpu_custom_call.1} parent=11 // pred_check
          %p186 = pneg %p107
        $region22: #{tpu_custom_call.1} parent=11 // pred_check_branch
          %188 = sbr.rel (%p186) target = $region24
        $region23: #{tpu_custom_call.1} parent=11 // pred_region
          %190 = vsyncadd [#allocation6], 0
          %s191 = sshll.u32 %s3, 4
          %s192 = int_to_ptr.hbm [resolvable:$true] %s191
          %s193 = sshll.u32 [#allocation7], 4
          %s194 = int_to_ptr.vmem [resolvable:$true] %s193
          %199 = dma.hbm_to_vmem [thread:$0]  %s192, 1024, %s194, [#allocation6], 64, 64, 4
        $region24: #{tpu_custom_call.1} parent=11 // pred_fallthru
          _
        // Predicated region
        $region25: #{tpu_custom_call.1} parent=11 // pred_check
          %p200 = pneg %p128
        $region26: #{tpu_custom_call.1} parent=11 // pred_check_branch
          %202 = sbr.rel (%p200) target = $region28
        $region27: #{tpu_custom_call.1} parent=11 // pred_region
          _
        $region28: #{tpu_custom_call.1} parent=11 // pred_fallthru
          _
      $region12: #{tpu_custom_call.1} parent=5 // pred_fallthru
        _
      %p203 = scmp.lt.s32.totalorder %s18, 2
      // Predicated region
      $region29: #{tpu_custom_call.1} parent=5 // pred_check
        %p204 = pneg %p203
      $region30: #{tpu_custom_call.1} parent=5 // pred_check_branch
        %206 = sbr.rel (%p204) target = $region32
      $region31: #{tpu_custom_call.1} parent=5 // pred_region
        // Predicated region
        $region33: #{tpu_custom_call.1} parent=31 // pred_check
          %p207 = pneg %p38
        $region34: #{tpu_custom_call.1} parent=31 // pred_check_branch
          %209 = sbr.rel (%p207) target = $region36
        $region35: #{tpu_custom_call.1} parent=31 // pred_region
          %s210 = sand.u32 %s28, 1
          %s211 = scalar_lea.sflag [#allocation3], %s210
          %s212 = sand.u32 %s28, 1
          %s213 = smul.addr %s212, 112
          %s214 = scalar_lea.vmem [#allocation2], %s213
          %s215 = smul.u32 2, %s18
          %s216 = ssub.s32 3, %s215
          %p217 = scmp.lt.s32.totalorder %s216, 2
          %s218 = scalar_select %p217, %s216, 2
          %s219 = smul.u32 8, %s218
          %s220 = smul.u32 %s219, 7
          %s221 = ssub.s32 112, %s220
          %s222 = sshll.u32 %s221, 4
          %223 = vsyncadd %s211, %s222
          %p224 = scmp.ne.s32.totalorder 0, %s220
          %s225 = smul.addr %s215, 7
          %s226 = smul.addr %s225, 8
          %s227 = scalar_lea.hbm %s0, %s226
          %s228 = smul.u32 56, %s218
          %s229 = sshll.u32 %s227, 4
          %s230 = int_to_ptr.hbm [resolvable:$true] %s229
          %s231 = sshll.u32 %s214, 4
          %s232 = int_to_ptr.vmem [resolvable:$true] %s231
          %s233 = sshll.u32 %s228, 4
          %237 = dma.hbm_to_vmem [thread:$0]  (%p224), %s230, %s233, %s232, %s211, 896, 896, 56
        $region36: #{tpu_custom_call.1} parent=31 // pred_fallthru
          _
      $region32: #{tpu_custom_call.1} parent=5 // pred_fallthru
        _
      %p238 = scmp.le.s32.totalorder 1, %s18
      %p239 = scmp.lt.s32.totalorder %s18, 3
      %p240 = pnand %p238, %p239
      %p241 = pneg %p240
      // Predicated region
      $region37: #{tpu_custom_call.1} parent=5 // pred_check
        _
      $region38: #{tpu_custom_call.1} parent=5 // pred_check_branch
        %243 = sbr.rel (%p240) target = $region40
      $region39: #{tpu_custom_call.1} parent=5 // pred_region
        %s244 = ssub.s32 %s18, 1
        %s245 = sand.u32 %s31, 1
        %s246 = scalar_lea.sflag [#allocation3], %s245
        %s247 = sand.u32 %s31, 1
        %s248 = smul.addr %s247, 112
        %s249 = scalar_lea.vmem [#allocation2], %s248
        // Predicated region
        $region41: #{tpu_custom_call.1} parent=39 // pred_check
          %p250 = pneg %p44
        $region42: #{tpu_custom_call.1} parent=39 // pred_check_branch
          %252 = sbr.rel (%p250) target = $region44
        $region43: #{tpu_custom_call.1} parent=39 // pred_region
          %254 = dma.done %s246, 1792
        $region44: #{tpu_custom_call.1} parent=39 // pred_fallthru
          _
        // Predicated region
        $region45: #{tpu_custom_call.1} parent=39 // pred_check
          %p255 = pneg %p65
        $region46: #{tpu_custom_call.1} parent=39 // pred_check_branch
          %257 = sbr.rel (%p255) target = $region48
        $region47: #{tpu_custom_call.1} parent=39 // pred_region
          %259 = dma.done [#allocation6], 6272
        $region48: #{tpu_custom_call.1} parent=39 // pred_fallthru
          _
        // Predicated region
        $region49: #{tpu_custom_call.1} parent=39 // pred_check
          %p260 = pneg %p107
        $region50: #{tpu_custom_call.1} parent=39 // pred_check_branch
          %262 = sbr.rel (%p260) target = $region52
        $region51: #{tpu_custom_call.1} parent=39 // pred_region
          %264 = dma.done [#allocation6], 1024
        $region52: #{tpu_custom_call.1} parent=39 // pred_fallthru
          _
        %s265 = sand.u32 %s31, 1
        %s266 = scalar_lea.sflag [#allocation3], %s265
        %s267 = sand.u32 %s31, 1
        %s268 = smul.addr %s267, 112
        %s269 = scalar_lea.vmem [#allocation2], %s268
        %p270 = pneg %p44
        %p271 = pneg %p41
        %p272 = pneg %p65
        %p273 = pneg %p62
        %p274 = pneg %p86
        %p275 = pneg %p83
        %p276 = pneg %p107
        %p277 = pneg %p104
        %p278 = pneg %p128
        %p279 = pneg %p125
        %p280 = pneg %p154
        %p281 = pneg %p151
        %s282 = sand.u32 %s141, 1
        %s283 = scalar_lea.sflag [#allocation4], %s282
        %s284 = sand.u32 %s141, 1
        %s285 = smul.addr %s284, 8
        %s286 = scalar_lea.vmem [#allocation8], %s285
        %s287 = smul.u32 2, %s23
        %s288 = ssub.s32 3, %s287
        %p289 = scmp.lt.s32.totalorder %s288, 2
        %s290 = scalar_select %p289, %s288, 2
        %s291 = smul.u32 8, %s290
        %s292 = smul.u32 %s291, 7
        %s293 = smul.u32 2, %s23
        %s294 = ssub.s32 3, %s293
        %p295 = scmp.lt.s32.totalorder %s294, 2
        %s296 = scalar_select %p295, %s294, 2
        %s297 = smul.u32 4, %s296
        %v299 = vld [vmem:[%s249] sm:$0xff]
        %v300 = vld [vmem:[%s249 + $0x8] sm:$0xff]
        %v301 = vld [vmem:[%s249 + $0x10] sm:$0xff]
        %v302 = vld [vmem:[%s249 + $0x18] sm:$0xff]
        %v303 = vld [vmem:[%s249 + $0x20] sm:$0xff]
        %v304 = vld [vmem:[%s249 + $0x28] sm:$0xff]
        %v305 = vld [vmem:[%s249 + $0x30] sm:$0xff]
        %v306 = vld [vmem:[%s249 + $0x38] sm:$0xff]
        %v307 = vld [vmem:[%s249 + $0x40] sm:$0xff]
        %v308 = vld [vmem:[%s249 + $0x48] sm:$0xff]
        %v309 = vld [vmem:[%s249 + $0x50] sm:$0xff]
        %v310 = vld [vmem:[%s249 + $0x58] sm:$0xff]
        %v311 = vld [vmem:[%s249 + $0x60] sm:$0xff]
        %v312 = vld [vmem:[%s249 + $0x68] sm:$0xff]
        %v313 = vpack.c.bf16 %v306, %v299
        %v314 = vpack.c.bf16 %v307, %v300
        %v315 = vpack.c.bf16 %v308, %v301
        %v316 = vpack.c.bf16 %v309, %v302
        %v317 = vpack.c.bf16 %v310, %v303
        %v318 = vpack.c.bf16 %v311, %v304
        %v319 = vpack.c.bf16 %v312, %v305
        %v320 = vld [vmem:[#allocation5] sm:$0xf]
        %v321 = vld [vmem:[#allocation5 + $0x4] sm:$0xf]
        %v322 = vld [vmem:[#allocation5 + $0x8] sm:$0xf]
        %v323 = vld [vmem:[#allocation5 + $0xc] sm:$0xf]
        %v324 = vld [vmem:[#allocation5 + $0x10] sm:$0xf]
        %v325 = vld [vmem:[#allocation5 + $0x14] sm:$0xf]
        %v326 = vld [vmem:[#allocation5 + $0x18] sm:$0xf]
        %v327 = vld [vmem:[#allocation5 + $0x1c] sm:$0xf]
        %v328 = vld [vmem:[#allocation5 + $0x20] sm:$0xf]
        %v329 = vld [vmem:[#allocation5 + $0x24] sm:$0xf]
        %v330 = vld [vmem:[#allocation5 + $0x28] sm:$0xf]
        %v331 = vld [vmem:[#allocation5 + $0x2c] sm:$0xf]
        %v332 = vld [vmem:[#allocation5 + $0x30] sm:$0xf]
        %v333 = vld [vmem:[#allocation5 + $0x34] sm:$0xf]
        %v334 = vld [vmem:[#allocation5 + $0x38] sm:$0xf]
        %v335 = vld [vmem:[#allocation5 + $0x3c] sm:$0xf]
        %v336 = vld [vmem:[#allocation5 + $0x40] sm:$0xf]
        %v337 = vld [vmem:[#allocation5 + $0x44] sm:$0xf]
        %v338 = vld [vmem:[#allocation5 + $0x48] sm:$0xf]
        %v339 = vld [vmem:[#allocation5 + $0x4c] sm:$0xf]
        %v340 = vld [vmem:[#allocation5 + $0x50] sm:$0xf]
        %v341 = vld [vmem:[#allocation5 + $0x54] sm:$0xf]
        %v342 = vld [vmem:[#allocation5 + $0x58] sm:$0xf]
        %v343 = vld [vmem:[#allocation5 + $0x5c] sm:$0xf]
        %v344 = vld [vmem:[#allocation5 + $0x60] sm:$0xf]
        %v345 = vld [vmem:[#allocation5 + $0x64] sm:$0xf]
        %v346 = vld [vmem:[#allocation5 + $0x68] sm:$0xf]
        %v347 = vld [vmem:[#allocation5 + $0x6c] sm:$0xf]
        %v348 = vld [vmem:[#allocation5 + $0x70] sm:$0xf]
        %v349 = vld [vmem:[#allocation5 + $0x74] sm:$0xf]
        %v350 = vld [vmem:[#allocation5 + $0x78] sm:$0xf]
        %v351 = vld [vmem:[#allocation5 + $0x7c] sm:$0xf]
        %v352 = vld [vmem:[#allocation5 + $0x80] sm:$0xf]
        %v353 = vld [vmem:[#allocation5 + $0x84] sm:$0xf]
        %v354 = vld [vmem:[#allocation5 + $0x88] sm:$0xf]
        %v355 = vld [vmem:[#allocation5 + $0x8c] sm:$0xf]
        %v356 = vld [vmem:[#allocation5 + $0x90] sm:$0xf]
        %v357 = vld [vmem:[#allocation5 + $0x94] sm:$0xf]
        %v358 = vld [vmem:[#allocation5 + $0x98] sm:$0xf]
        %v359 = vld [vmem:[#allocation5 + $0x9c] sm:$0xf]
        %v360 = vld [vmem:[#allocation5 + $0xa0] sm:$0xf]
        %v361 = vld [vmem:[#allocation5 + $0xa4] sm:$0xf]
        %v362 = vld [vmem:[#allocation5 + $0xa8] sm:$0xf]
        %v363 = vld [vmem:[#allocation5 + $0xac] sm:$0xf]
        %v364 = vld [vmem:[#allocation5 + $0xb0] sm:$0xf]
        %v365 = vld [vmem:[#allocation5 + $0xb4] sm:$0xf]
        %v366 = vld [vmem:[#allocation5 + $0xb8] sm:$0xf]
        %v367 = vld [vmem:[#allocation5 + $0xbc] sm:$0xf]
        %v368 = vld [vmem:[#allocation5 + $0xc0] sm:$0xf]
        %v369 = vld [vmem:[#allocation5 + $0xc4] sm:$0xf]
        %v370 = vld [vmem:[#allocation5 + $0xc8] sm:$0xf]
        %v371 = vld [vmem:[#allocation5 + $0xcc] sm:$0xf]
        %v372 = vld [vmem:[#allocation5 + $0xd0] sm:$0xf]
        %v373 = vld [vmem:[#allocation5 + $0xd4] sm:$0xf]
        %v374 = vld [vmem:[#allocation5 + $0xd8] sm:$0xf]
        %v375 = vld [vmem:[#allocation5 + $0xdc] sm:$0xf]
        %v376 = vld [vmem:[#allocation5 + $0xe0] sm:$0xf]
        %v377 = vld [vmem:[#allocation5 + $0xe4] sm:$0xf]
        %v378 = vld [vmem:[#allocation5 + $0xe8] sm:$0xf]
        %v379 = vld [vmem:[#allocation5 + $0xec] sm:$0xf]
        %v380 = vld [vmem:[#allocation5 + $0xf0] sm:$0xf]
        %v381 = vld [vmem:[#allocation5 + $0xf4] sm:$0xf]
        %v382 = vld [vmem:[#allocation5 + $0xf8] sm:$0xf]
        %v383 = vld [vmem:[#allocation5 + $0xfc] sm:$0xf]
        %v384 = vld [vmem:[#allocation5 + $0x100] sm:$0xf]
        %v385 = vld [vmem:[#allocation5 + $0x104] sm:$0xf]
        %v386 = vld [vmem:[#allocation5 + $0x108] sm:$0xf]
        %v387 = vld [vmem:[#allocation5 + $0x10c] sm:$0xf]
        %v388 = vld [vmem:[#allocation5 + $0x110] sm:$0xf]
        %v389 = vld [vmem:[#allocation5 + $0x114] sm:$0xf]
        %v390 = vld [vmem:[#allocation5 + $0x118] sm:$0xf]
        %v391 = vld [vmem:[#allocation5 + $0x11c] sm:$0xf]
        %v392 = vld [vmem:[#allocation5 + $0x120] sm:$0xf]
        %v393 = vld [vmem:[#allocation5 + $0x124] sm:$0xf]
        %v394 = vld [vmem:[#allocation5 + $0x128] sm:$0xf]
        %v395 = vld [vmem:[#allocation5 + $0x12c] sm:$0xf]
        %v396 = vld [vmem:[#allocation5 + $0x130] sm:$0xf]
        %v397 = vld [vmem:[#allocation5 + $0x134] sm:$0xf]
        %v398 = vld [vmem:[#allocation5 + $0x138] sm:$0xf]
        %v399 = vld [vmem:[#allocation5 + $0x13c] sm:$0xf]
        %v400 = vld [vmem:[#allocation5 + $0x140] sm:$0xf]
        %v401 = vld [vmem:[#allocation5 + $0x144] sm:$0xf]
        %v402 = vld [vmem:[#allocation5 + $0x148] sm:$0xf]
        %v403 = vld [vmem:[#allocation5 + $0x14c] sm:$0xf]
        %v404 = vld [vmem:[#allocation5 + $0x150] sm:$0xf]
        %v405 = vld [vmem:[#allocation5 + $0x154] sm:$0xf]
        %v406 = vld [vmem:[#allocation5 + $0x158] sm:$0xf]
        %v407 = vld [vmem:[#allocation5 + $0x15c] sm:$0xf]
        %v408 = vld [vmem:[#allocation5 + $0x160] sm:$0xf]
        %v409 = vld [vmem:[#allocation5 + $0x164] sm:$0xf]
        %v410 = vld [vmem:[#allocation5 + $0x168] sm:$0xf]
        %v411 = vld [vmem:[#allocation5 + $0x16c] sm:$0xf]
        %v412 = vld [vmem:[#allocation5 + $0x170] sm:$0xf]
        %v413 = vld [vmem:[#allocation5 + $0x174] sm:$0xf]
        %v414 = vld [vmem:[#allocation5 + $0x178] sm:$0xf]
        %v415 = vld [vmem:[#allocation5 + $0x17c] sm:$0xf]
        %v416 = vld [vmem:[#allocation5 + $0x180] sm:$0xf]
        %v417 = vld [vmem:[#allocation5 + $0x184] sm:$0xf]
        %v418 = vld [vmem:[%s2] sm:$0x1]
        %v420 = vperm.slane %v418, 0
        %v520 = vunpack.c.l.b16 %v320
        %v521 = vunpack.c.l.b16 %v321
        %v522 = vunpack.c.l.b16 %v322
        %v523 = vunpack.c.l.b16 %v323
        %v524 = vunpack.c.l.b16 %v324
        %v525 = vunpack.c.l.b16 %v325
        %v526 = vunpack.c.l.b16 %v326
        %v527 = vunpack.c.l.b16 %v327
        %v528 = vunpack.c.l.b16 %v328
        %v529 = vunpack.c.l.b16 %v329
        %v530 = vunpack.c.l.b16 %v330
        %v531 = vunpack.c.l.b16 %v331
        %v532 = vunpack.c.l.b16 %v332
        %v533 = vunpack.c.l.b16 %v333
        %v534 = vunpack.c.l.b16 %v334
        %v535 = vunpack.c.l.b16 %v335
        %v536 = vunpack.c.l.b16 %v336
        %v537 = vunpack.c.l.b16 %v337
        %v538 = vunpack.c.l.b16 %v338
        %v539 = vunpack.c.l.b16 %v339
        %v540 = vunpack.c.l.b16 %v340
        %v541 = vunpack.c.l.b16 %v341
        %v542 = vunpack.c.l.b16 %v342
        %v543 = vunpack.c.l.b16 %v343
        %v544 = vunpack.c.l.b16 %v344
        %v545 = vunpack.c.l.b16 %v345
        %v546 = vunpack.c.l.b16 %v346
        %v547 = vunpack.c.l.b16 %v347
        %v548 = vunpack.c.l.b16 %v348
        %v549 = vunpack.c.l.b16 %v349
        %v550 = vunpack.c.l.b16 %v350
        %v551 = vunpack.c.l.b16 %v351
        %v552 = vunpack.c.l.b16 %v352
        %v553 = vunpack.c.l.b16 %v353
        %v554 = vunpack.c.l.b16 %v354
        %v555 = vunpack.c.l.b16 %v355
        %v556 = vunpack.c.l.b16 %v356
        %v557 = vunpack.c.l.b16 %v357
        %v558 = vunpack.c.l.b16 %v358
        %v559 = vunpack.c.l.b16 %v359
        %v560 = vunpack.c.l.b16 %v360
        %v561 = vunpack.c.l.b16 %v361
        %v562 = vunpack.c.l.b16 %v362
        %v563 = vunpack.c.l.b16 %v363
        %v564 = vunpack.c.l.b16 %v364
        %v565 = vunpack.c.l.b16 %v365
        %v566 = vunpack.c.l.b16 %v366
        %v567 = vunpack.c.l.b16 %v367
        %v568 = vunpack.c.l.b16 %v368
        %v569 = vunpack.c.l.b16 %v369
        %v570 = vunpack.c.l.b16 %v370
        %v571 = vunpack.c.l.b16 %v371
        %v572 = vunpack.c.l.b16 %v372
        %v573 = vunpack.c.l.b16 %v373
        %v574 = vunpack.c.l.b16 %v374
        %v575 = vunpack.c.l.b16 %v375
        %v576 = vunpack.c.l.b16 %v376
        %v577 = vunpack.c.l.b16 %v377
        %v578 = vunpack.c.l.b16 %v378
        %v579 = vunpack.c.l.b16 %v379
        %v580 = vunpack.c.l.b16 %v380
        %v581 = vunpack.c.l.b16 %v381
        %v582 = vunpack.c.l.b16 %v382
        %v583 = vunpack.c.l.b16 %v383
        %v584 = vunpack.c.l.b16 %v384
        %v585 = vunpack.c.l.b16 %v385
        %v586 = vunpack.c.l.b16 %v386
        %v587 = vunpack.c.l.b16 %v387
        %v588 = vunpack.c.l.b16 %v388
        %v589 = vunpack.c.l.b16 %v389
        %v590 = vunpack.c.l.b16 %v390
        %v591 = vunpack.c.l.b16 %v391
        %v592 = vunpack.c.l.b16 %v392
        %v593 = vunpack.c.l.b16 %v393
        %v594 = vunpack.c.l.b16 %v394
        %v595 = vunpack.c.l.b16 %v395
        %v596 = vunpack.c.l.b16 %v396
        %v597 = vunpack.c.l.b16 %v397
        %v598 = vunpack.c.l.b16 %v398
        %v599 = vunpack.c.l.b16 %v399
        %v600 = vunpack.c.l.b16 %v400
        %v601 = vunpack.c.l.b16 %v401
        %v602 = vunpack.c.l.b16 %v402
        %v603 = vunpack.c.l.b16 %v403
        %v604 = vunpack.c.l.b16 %v404
        %v605 = vunpack.c.l.b16 %v405
        %v606 = vunpack.c.l.b16 %v406
        %v607 = vunpack.c.l.b16 %v407
        %v608 = vunpack.c.l.b16 %v408
        %v609 = vunpack.c.l.b16 %v409
        %v610 = vunpack.c.l.b16 %v410
        %v611 = vunpack.c.l.b16 %v411
        %v612 = vunpack.c.l.b16 %v412
        %v613 = vunpack.c.l.b16 %v413
        %v614 = vunpack.c.l.b16 %v414
        %v615 = vunpack.c.l.b16 %v415
        %v616 = vunpack.c.l.b16 %v416
        %v617 = vunpack.c.l.b16 %v417
        %v618 = vpack.c.b16 %v521, %v520
        %v619 = vpack.c.b16 %v523, %v522
        %v620 = vpack.c.b16 %v525, %v524
        %v621 = vpack.c.b16 %v527, %v526
        %v622 = vpack.c.b16 %v529, %v528
        %v623 = vpack.c.b16 %v531, %v530
        %v624 = vpack.c.b16 %v533, %v532
        %v625 = vpack.c.b16 %v535, %v534
        %v626 = vpack.c.b16 %v537, %v536
        %v627 = vpack.c.b16 %v539, %v538
        %v628 = vpack.c.b16 %v541, %v540
        %v629 = vpack.c.b16 %v543, %v542
        %v630 = vpack.c.b16 %v545, %v544
        %v631 = vpack.c.b16 %v547, %v546
        %v632 = vpack.c.b16 %v549, %v548
        %v633 = vpack.c.b16 %v551, %v550
        %v634 = vpack.c.b16 %v553, %v552
        %v635 = vpack.c.b16 %v555, %v554
        %v636 = vpack.c.b16 %v557, %v556
        %v637 = vpack.c.b16 %v559, %v558
        %v638 = vpack.c.b16 %v561, %v560
        %v639 = vpack.c.b16 %v563, %v562
        %v640 = vpack.c.b16 %v565, %v564
        %v641 = vpack.c.b16 %v567, %v566
        %v642 = vpack.c.b16 %v569, %v568
        %v643 = vpack.c.b16 %v571, %v570
        %v644 = vpack.c.b16 %v573, %v572
        %v645 = vpack.c.b16 %v575, %v574
        %v646 = vpack.c.b16 %v577, %v576
        %v647 = vpack.c.b16 %v579, %v578
        %v648 = vpack.c.b16 %v581, %v580
        %v649 = vpack.c.b16 %v583, %v582
        %v650 = vpack.c.b16 %v585, %v584
        %v651 = vpack.c.b16 %v587, %v586
        %v652 = vpack.c.b16 %v589, %v588
        %v653 = vpack.c.b16 %v591, %v590
        %v654 = vpack.c.b16 %v593, %v592
        %v655 = vpack.c.b16 %v595, %v594
        %v656 = vpack.c.b16 %v597, %v596
        %v657 = vpack.c.b16 %v599, %v598
        %v658 = vpack.c.b16 %v601, %v600
        %v659 = vpack.c.b16 %v603, %v602
        %v660 = vpack.c.b16 %v605, %v604
        %v661 = vpack.c.b16 %v607, %v606
        %v662 = vpack.c.b16 %v609, %v608
        %v663 = vpack.c.b16 %v611, %v610
        %v664 = vpack.c.b16 %v613, %v612
        %v665 = vpack.c.b16 %v615, %v614
        %v666 = vpack.c.b16 %v617, %v616
        %vm716 = vcmask 130048
        %v718 = vsel %vm716, %v319, 0
        %720 = vmatpush.bf16.msra.mxu0 %v625
        %721 = vmatpush.bf16.msra.mxu0 %v624
        %722 = vmatpush.bf16.msra.mxu0 %v623
        %723 = vmatpush.bf16.msra.mxu0 %v622
        %724 = vmatpush.bf16.msra.mxu0 %v621
        %725 = vmatpush.bf16.msra.mxu0 %v620
        %726 = vmatpush.bf16.msra.mxu0 %v619
        %727 = vmatpush.bf16.msra.mxu0 %v618
        %728 = vmatmul.bf16.gmra.mxu0 %v313
        %v729 = vpop.f32.mrf.mxu0
        %v730 = vadd.f32 %v420, %v729
        %v731 = vpop.f32.mrf.mxu0
        %v732 = vadd.f32 %v420, %v731
        %733 = vdwg.mxu0
        %734 = vmatpush.bf16.msra.mxu0 %v633
        %735 = vmatpush.bf16.msra.mxu0 %v632
        %736 = vmatpush.bf16.msra.mxu0 %v631
        %737 = vmatpush.bf16.msra.mxu0 %v630
        %738 = vmatpush.bf16.msra.mxu0 %v629
        %739 = vmatpush.bf16.msra.mxu0 %v628
        %740 = vmatpush.bf16.msra.mxu0 %v627
        %741 = vmatpush.bf16.msra.mxu0 %v626
        %742 = vmatmul.bf16.gmra.mxu0 %v314
        %v743 = vpop.f32.mrf.mxu0
        %v744 = vadd.f32 %v730, %v743
        %v745 = vpop.f32.mrf.mxu0
        %v746 = vadd.f32 %v732, %v745
        %747 = vdwg.mxu0
        %748 = vmatpush.bf16.msra.mxu0 %v641
        %749 = vmatpush.bf16.msra.mxu0 %v640
        %750 = vmatpush.bf16.msra.mxu0 %v639
        %751 = vmatpush.bf16.msra.mxu0 %v638
        %752 = vmatpush.bf16.msra.mxu0 %v637
        %753 = vmatpush.bf16.msra.mxu0 %v636
        %754 = vmatpush.bf16.msra.mxu0 %v635
        %755 = vmatpush.bf16.msra.mxu0 %v634
        %756 = vmatmul.bf16.gmra.mxu0 %v315
        %v757 = vpop.f32.mrf.mxu0
        %v758 = vadd.f32 %v744, %v757
        %v759 = vpop.f32.mrf.mxu0
        %v760 = vadd.f32 %v746, %v759
        %761 = vdwg.mxu0
        %762 = vmatpush.bf16.msra.mxu0 %v649
        %763 = vmatpush.bf16.msra.mxu0 %v648
        %764 = vmatpush.bf16.msra.mxu0 %v647
        %765 = vmatpush.bf16.msra.mxu0 %v646
        %766 = vmatpush.bf16.msra.mxu0 %v645
        %767 = vmatpush.bf16.msra.mxu0 %v644
        %768 = vmatpush.bf16.msra.mxu0 %v643
        %769 = vmatpush.bf16.msra.mxu0 %v642
        %770 = vmatmul.bf16.gmra.mxu0 %v316
        %v771 = vpop.f32.mrf.mxu0
        %v772 = vadd.f32 %v758, %v771
        %v773 = vpop.f32.mrf.mxu0
        %v774 = vadd.f32 %v760, %v773
        %775 = vdwg.mxu0
        %776 = vmatpush.bf16.msra.mxu0 %v657
        %777 = vmatpush.bf16.msra.mxu0 %v656
        %778 = vmatpush.bf16.msra.mxu0 %v655
        %779 = vmatpush.bf16.msra.mxu0 %v654
        %780 = vmatpush.bf16.msra.mxu0 %v653
        %781 = vmatpush.bf16.msra.mxu0 %v652
        %782 = vmatpush.bf16.msra.mxu0 %v651
        %783 = vmatpush.bf16.msra.mxu0 %v650
        %784 = vmatmul.bf16.gmra.mxu0 %v317
        %v785 = vpop.f32.mrf.mxu0
        %v786 = vadd.f32 %v772, %v785
        %v787 = vpop.f32.mrf.mxu0
        %v788 = vadd.f32 %v774, %v787
        %789 = vdwg.mxu0
        %790 = vmatpush.bf16.msra.mxu0 %v665
        %791 = vmatpush.bf16.msra.mxu0 %v664
        %792 = vmatpush.bf16.msra.mxu0 %v663
        %793 = vmatpush.bf16.msra.mxu0 %v662
        %794 = vmatpush.bf16.msra.mxu0 %v661
        %795 = vmatpush.bf16.msra.mxu0 %v660
        %796 = vmatpush.bf16.msra.mxu0 %v659
        %797 = vmatpush.bf16.msra.mxu0 %v658
        %798 = vmatmul.bf16.gmra.mxu0 %v318
        %v799 = vpop.f32.mrf.mxu0
        %v800 = vadd.f32 %v786, %v799
        %v801 = vpop.f32.mrf.mxu0
        %v802 = vadd.f32 %v788, %v801
        %803 = vdwg.mxu0
        %804 = vmatpush.bf16.msra.mxu0 0
        %805 = vmatpush.bf16.msra.mxu0 0
        %806 = vmatpush.bf16.msra.mxu0 0
        %807 = vmatpush.bf16.msra.mxu0 0
        %808 = vmatpush.bf16.msra.mxu0 0
        %809 = vmatpush.bf16.msra.mxu0 0
        %810 = vmatpush.bf16.msra.mxu0 0
        %811 = vmatpush.bf16.msra.mxu0 %v666
        %812 = vmatmul.bf16.gmra.mxu0 %v718
        %v813 = vpop.f32.mrf.mxu0
        %v814 = vadd.f32 %v800, %v813
        %v815 = vpop.f32.mrf.mxu0
        %v816 = vadd.f32 %v802, %v815
        %817 = vdwg.mxu0
        %v818 = vmax.f32 %v814, 0.0
        %v819 = vmax.f32 %v816, 0.0
        %v820 = vpack.c.bf16 %v819, %v818
        %v821 = vld [vmem:[#allocation7] sm:$0xf]
        %v822 = vld [vmem:[#allocation7 + $0x4] sm:$0xf]
        %v823 = vld [vmem:[#allocation7 + $0x8] sm:$0xf]
        %v824 = vld [vmem:[#allocation7 + $0xc] sm:$0xf]
        %v825 = vld [vmem:[#allocation7 + $0x10] sm:$0xf]
        %v826 = vld [vmem:[#allocation7 + $0x14] sm:$0xf]
        %v827 = vld [vmem:[#allocation7 + $0x18] sm:$0xf]
        %v828 = vld [vmem:[#allocation7 + $0x1c] sm:$0xf]
        %v829 = vld [vmem:[#allocation7 + $0x20] sm:$0xf]
        %v830 = vld [vmem:[#allocation7 + $0x24] sm:$0xf]
        %v831 = vld [vmem:[#allocation7 + $0x28] sm:$0xf]
        %v832 = vld [vmem:[#allocation7 + $0x2c] sm:$0xf]
        %v833 = vld [vmem:[#allocation7 + $0x30] sm:$0xf]
        %v834 = vld [vmem:[#allocation7 + $0x34] sm:$0xf]
        %v835 = vld [vmem:[#allocation7 + $0x38] sm:$0xf]
        %v836 = vld [vmem:[#allocation7 + $0x3c] sm:$0xf]
        %v837 = vld [vmem:[%s4] sm:$0x1]
        %v839 = vperm.slane %v837, 0
        %v857 = vunpack.c.l.b16 %v821
        %v858 = vunpack.c.l.b16 %v822
        %v859 = vunpack.c.l.b16 %v823
        %v860 = vunpack.c.l.b16 %v824
        %v861 = vunpack.c.l.b16 %v825
        %v862 = vunpack.c.l.b16 %v826
        %v863 = vunpack.c.l.b16 %v827
        %v864 = vunpack.c.l.b16 %v828
        %v865 = vunpack.c.l.b16 %v829
        %v866 = vunpack.c.l.b16 %v830
        %v867 = vunpack.c.l.b16 %v831
        %v868 = vunpack.c.l.b16 %v832
        %v869 = vunpack.c.l.b16 %v833
        %v870 = vunpack.c.l.b16 %v834
        %v871 = vunpack.c.l.b16 %v835
        %v872 = vunpack.c.l.b16 %v836
        %v873 = vpack.c.b16 %v858, %v857
        %v874 = vpack.c.b16 %v860, %v859
        %v875 = vpack.c.b16 %v862, %v861
        %v876 = vpack.c.b16 %v864, %v863
        %v877 = vpack.c.b16 %v866, %v865
        %v878 = vpack.c.b16 %v868, %v867
        %v879 = vpack.c.b16 %v870, %v869
        %v880 = vpack.c.b16 %v872, %v871
        %889 = vmatpush.bf16.msra.mxu0 %v880
        %890 = vmatpush.bf16.msra.mxu0 %v879
        %891 = vmatpush.bf16.msra.mxu0 %v878
        %892 = vmatpush.bf16.msra.mxu0 %v877
        %893 = vmatpush.bf16.msra.mxu0 %v876
        %894 = vmatpush.bf16.msra.mxu0 %v875
        %895 = vmatpush.bf16.msra.mxu0 %v874
        %896 = vmatpush.bf16.msra.mxu0 %v873
        %897 = vmatmul.bf16.gmra.mxu0 %v820
        %v898 = vpop.f32.mrf.mxu0
        %v899 = vadd.f32 %v839, %v898
        %v900 = vpop.f32.mrf.mxu0
        %v901 = vadd.f32 %v839, %v900
        %902 = vdwg.mxu0
        %v903 = vpack.c.bf16 %v899, %v899
        %v904 = vpack.c.bf16 %v901, %v901
        %905 = vst [vmem:[%s286] sm:$0xf] %v903
        %906 = vst [vmem:[%s286 + $0x4] sm:$0xf] %v904
        %s907 = sand.u32 %s141, 1
        %s908 = scalar_lea.sflag [#allocation4], %s907
        %s909 = sand.u32 %s141, 1
        %s910 = smul.addr %s909, 8
        %s911 = scalar_lea.vmem [#allocation8], %s910
        // Predicated region
        $region53: #{tpu_custom_call.1} parent=39 // pred_check
          %p912 = pneg %p151
        $region54: #{tpu_custom_call.1} parent=39 // pred_check_branch
          %914 = sbr.rel (%p912) target = $region56
        $region55: #{tpu_custom_call.1} parent=39 // pred_region
          %s915 = smul.u32 2, %s23
          %s916 = ssub.s32 3, %s915
          %p917 = scmp.lt.s32.totalorder %s916, 2
          %s918 = scalar_select %p917, %s916, 2
          %s919 = smul.u32 4, %s918
          %s920 = ssub.s32 8, %s919
          %s921 = sshll.u32 %s920, 4
          %922 = vsyncadd %s908, %s921
          %p923 = scmp.ne.s32.totalorder 0, %s919
          %s924 = smul.addr %s915, 4
          %s925 = scalar_lea.hbm %s5, %s924
          %s926 = smul.u32 4, %s918
          %s927 = sshll.u32 %s911, 4
          %s928 = int_to_ptr.vmem [resolvable:$true] %s927
          %s929 = sshll.u32 %s925, 4
          %s930 = int_to_ptr.hbm [resolvable:$true] %s929
          %s931 = sshll.u32 %s926, 4
          %935 = dma.vmem_to_hbm [thread:$0]  (%p923), %s928, %s931, %s930, %s908, 64, 64, 4
        $region56: #{tpu_custom_call.1} parent=39 // pred_fallthru
          _
      $region40: #{tpu_custom_call.1} parent=5 // pred_fallthru
        _
      %p936 = scmp.le.s32.totalorder 2, %s18
      // Predicated region
      $region57: #{tpu_custom_call.1} parent=5 // pred_check
        %p937 = pneg %p936
      $region58: #{tpu_custom_call.1} parent=5 // pred_check_branch
        %939 = sbr.rel (%p937) target = $region60
      $region59: #{tpu_custom_call.1} parent=5 // pred_region
        %s940 = ssub.s32 %s18, 2
        // Predicated region
        $region61: #{tpu_custom_call.1} parent=59 // pred_check
          %p941 = pneg %p157
        $region62: #{tpu_custom_call.1} parent=59 // pred_check_branch
          %943 = sbr.rel (%p941) target = $region64
        $region63: #{tpu_custom_call.1} parent=59 // pred_region
          %s944 = sand.u32 %s142, 1
          %s945 = scalar_lea.sflag [#allocation4], %s944
          %s946 = sand.u32 %s142, 1
          %s947 = smul.addr %s946, 8
          %s948 = scalar_lea.vmem [#allocation8], %s947
          %950 = dma.done %s945, 128
        $region64: #{tpu_custom_call.1} parent=59 // pred_fallthru
          _
      $region60: #{tpu_custom_call.1} parent=5 // pred_fallthru
        _
    $region6: #{tpu_custom_call.1} parent=1 // loop_footer
      %s22 = sadd.s32 1, %s18
    $region7: #{tpu_custom_call.1} parent=1 // loop_footer_branch
      %17 = sbr.rel target = $region3
    $region8: #{tpu_custom_call.1} parent=1 // loop_exit
      _
    %951 = vsyncpa [#allocation3], 1
    %s952 = scalar_lea.sflag [#allocation3], 1
    %953 = vsyncpa %s952, 1
    %954 = vsyncpa [#allocation6], 1
    %955 = vsyncpa [#allocation4], 1
    %s956 = scalar_lea.sflag [#allocation4], 1
    %957 = vsyncpa %s956, 1

</llo_original>
